<compile_context>
chip_gen: v7x
topology: tpu7x:2x2x1
jax: 0.10.0
libtpu: 0.0.40
codegen_flags: <defaults>
</compile_context>

<pallas_src>
import functools

import jax
import jax.numpy as jnp
from jax.experimental import pallas as pl
from jax.experimental.pallas import tpu as pltpu

LANE = 128


def _round_up(n, m):
    return pl.cdiv(n, m) * m


def mlp_kernel(x_ref, w1_ref, b1_ref, w2_ref, b2_ref, w3_ref, b3_ref, o_ref):
    cdt = w1_ref.dtype  # MXU streaming dtype (bf16 by default)
    # fc1 + ReLU (accumulate / bias / ReLU in f32)
    h = jnp.dot(x_ref[...].astype(cdt), w1_ref[...],
                preferred_element_type=jnp.float32)
    h = jnp.maximum(h + b1_ref[...], 0.0)
    # fc2 + ReLU
    h = jnp.dot(h.astype(cdt), w2_ref[...], preferred_element_type=jnp.float32)
    h = jnp.maximum(h + b2_ref[...], 0.0)
    # fc3 (no activation) -> lane-dense padded output
    h = jnp.dot(h.astype(cdt), w3_ref[...], preferred_element_type=jnp.float32)
    o_ref[...] = (h + b3_ref[...]).astype(o_ref.dtype)


def prepare_params(w1, b1, w2, b2, w3, b3, *, compute_dtype=jnp.bfloat16,
                   lane=LANE):
    """One-time layout prep. Call ONCE per model, not per forward.

    Transposes PyTorch-layout (out, in) weights to (in, out), zero-pads the
    hidden / class dims up to a multiple of `lane` (lane-dense matmuls and
    output store), and casts weights to `compute_dtype` for the MXU stream.
    Biases stay f32 (added post-matmul in f32). Returns (params, num_classes);
    keep num_classes as a plain Python int (it must stay static under jit).
    """
    input_size = w1.shape[1]
    hidden = w1.shape[0]
    num_classes = int(w3.shape[0])
    hp = _round_up(hidden, lane)
    cp = _round_up(num_classes, lane)

    def pad2(a, rows, cols, dtype):
        a = jnp.pad(a, ((0, rows - a.shape[0]), (0, cols - a.shape[1])))
        return a.astype(dtype)

    w1t = pad2(w1.T, input_size, hp, compute_dtype)   # (K,  Hp)
    w2t = pad2(w2.T, hp, hp, compute_dtype)           # (Hp, Hp)
    w3t = pad2(w3.T, hp, cp, compute_dtype)           # (Hp, Cp)
    b1r = pad2(b1[None, :], 1, hp, jnp.float32)       # (1,  Hp)
    b2r = pad2(b2[None, :], 1, hp, jnp.float32)       # (1,  Hp)
    b3r = pad2(b3[None, :], 1, cp, jnp.float32)       # (1,  Cp)
    params = (w1t, b1r, w2t, b2r, w3t, b3r)
    return params, num_classes


def _choose_batch_tile(B, block_b):
    """Pick a sublane-aligned batch tile; keep >=2 grid steps when B is large
    so v7x's two TensorCores both get work, and spread B evenly to minimize
    padding."""
    if B <= 16:
        return _round_up(B, 8)
    steps = max(2, pl.cdiv(B, block_b))
    return _round_up(pl.cdiv(B, steps), 8)


@functools.partial(jax.jit, static_argnames=("block_b",))
def mlp_forward_padded(x, params, *, block_b=2048):
    """Hot path. x: (B, input_size); params: arrays from prepare_params.

    Returns padded logits (Bp, Cp) with Cp a multiple of 128 and Bp >= B.
    Downstream consumers (argmax / loss) should slice [:B, :num_classes]
    themselves so the lane-dense output stream isn't re-read just to narrow it.
    """
    w1t, b1r, w2t, b2r, w3t, b3r = params
    B, K = x.shape
    Hp = w1t.shape[1]
    Cp = w3t.shape[1]
    out_dtype = w1t.dtype

    TB = _choose_batch_tile(B, block_b)
    Bp = _round_up(B, TB)
    x_p = jnp.pad(x, ((0, Bp - B), (0, 0)))  # no-op when Bp == B
    grid = (Bp // TB,)

    def resident(shape):
        # Weights/biases: same block every grid step -> stay VMEM-resident.
        return pl.BlockSpec(shape, lambda i: (0, 0))

    itemsize = jnp.dtype(out_dtype).itemsize
    flops = 2 * Bp * (K * Hp + Hp * Hp + Hp * Cp)
    bytes_accessed = (
        x_p.size * x_p.dtype.itemsize
        + sum(int(a.size) * a.dtype.itemsize for a in params)
        + Bp * Cp * itemsize
    )

    # TODO(synk): if a profile shows exposed output-write DMA at large TB, add
    # pipeline_mode=pl.Buffered(3) on out_specs (and Buffered(1) on the
    # resident weight specs to reclaim their second buffer).
    return pl.pallas_call(
        mlp_kernel,
        out_shape=jax.ShapeDtypeStruct((Bp, Cp), out_dtype),
        grid=grid,
        in_specs=[
            pl.BlockSpec((TB, K), lambda i: (i, 0)),   # activation stream
            resident(w1t.shape), resident(b1r.shape),
            resident(w2t.shape), resident(b2r.shape),
            resident(w3t.shape), resident(b3r.shape),
        ],
        out_specs=pl.BlockSpec((TB, Cp), lambda i: (i, 0)),
        compiler_params=pltpu.CompilerParams(
            dimension_semantics=("parallel",),  # shards batch on v7x's 2 TCs
        ),
        cost_estimate=pl.CostEstimate(
            flops=flops, transcendentals=0, bytes_accessed=bytes_accessed
        ),
    )(x_p, w1t, b1r, w2t, b2r, w3t, b3r)


def mlp_forward(x, params, num_classes, *, block_b=2048):
    """Convenience wrapper: returns (B, num_classes) logits.

    num_classes must be a Python int (static). Prefer mlp_forward_padded in a
    larger pipeline to avoid the extra HBM pass of this slice.
    """
    out_padded = mlp_forward_padded(x, params, block_b=block_b)
    return out_padded[: x.shape[0], :num_classes]


def init_linear(key, out_features, in_features):
    # Deterministic init mimicking torch.nn.Linear: U(-1/sqrt(fan_in), 1/sqrt(fan_in))
    kw, kb = jax.random.split(key)
    bound = 1.0 / (in_features ** 0.5)
    w = jax.random.uniform(kw, (out_features, in_features), jnp.float32, -bound, bound)
    b = jax.random.uniform(kb, (out_features,), jnp.float32, -bound, bound)
    return w, b


if __name__ == "__main__":
    input_size, hidden_size, num_classes = 32, 64, 10
    batch = 8

    key = jax.random.PRNGKey(0)
    kx, k1, k2, k3 = jax.random.split(key, 4)

    x = jax.random.normal(kx, (batch, input_size), jnp.float32)
    w1, b1 = init_linear(k1, hidden_size, input_size)
    w2, b2 = init_linear(k2, hidden_size, hidden_size)
    w3, b3 = init_linear(k3, num_classes, hidden_size)

    # One-time layout prep (outside the per-call hot path).
    params, n_cls = prepare_params(w1, b1, w2, b2, w3, b3)
    params = jax.block_until_ready(params)

    out = mlp_forward(x, params, n_cls)
    out = jax.block_until_ready(out)

    # Pure-JAX f32 reference for sanity (kernel streams bf16 -> relaxed tol).
    ref = jnp.maximum(x @ w1.T + b1, 0.0)
    ref = jnp.maximum(ref @ w2.T + b2, 0.0)
    ref = ref @ w3.T + b3
    assert out.shape == (batch, num_classes)
    assert jnp.allclose(out.astype(jnp.float32), ref, atol=5e-2, rtol=5e-2), (
        float(jnp.max(jnp.abs(out.astype(jnp.float32) - ref)))
    )

    print("KERNEL_OK")
</pallas_src>

<mosaic_0001>
module attributes {stable_mosaic.version = 11 : i64} {
  func.func @mlp_kernel(%arg0: i32, %arg1: memref<8x32xf32, #tpu.memory_space<vmem>>, %arg2: memref<32x128xbf16, #tpu.memory_space<vmem>>, %arg3: memref<1x128xf32, #tpu.memory_space<vmem>>, %arg4: memref<128x128xbf16, #tpu.memory_space<vmem>>, %arg5: memref<1x128xf32, #tpu.memory_space<vmem>>, %arg6: memref<128x128xbf16, #tpu.memory_space<vmem>>, %arg7: memref<1x128xf32, #tpu.memory_space<vmem>>, %arg8: memref<8x128xbf16, #tpu.memory_space<vmem>>) attributes {dimension_semantics = [#tpu.dimension_semantics<parallel>], iteration_bounds = array<i64: 1>, scalar_prefetch = 0 : i64, scratch_operands = 0 : i64, tpu.core_type = #tpu.core_type<tc>, window_params = [{transform_indices = @transform_0, window_bounds = array<i64: 8, 32>}, {pipeline_mode = #tpu.pipeline_mode<synchronous>, transform_indices = @transform_1, window_bounds = array<i64: 32, 128>}, {pipeline_mode = #tpu.pipeline_mode<synchronous>, transform_indices = @transform_2, window_bounds = array<i64: 1, 128>}, {pipeline_mode = #tpu.pipeline_mode<synchronous>, transform_indices = @transform_3, window_bounds = array<i64: 128, 128>}, {pipeline_mode = #tpu.pipeline_mode<synchronous>, transform_indices = @transform_4, window_bounds = array<i64: 1, 128>}, {pipeline_mode = #tpu.pipeline_mode<synchronous>, transform_indices = @transform_5, window_bounds = array<i64: 128, 128>}, {pipeline_mode = #tpu.pipeline_mode<synchronous>, transform_indices = @transform_6, window_bounds = array<i64: 1, 128>}, {transform_indices = @transform_7, window_bounds = array<i64: 8, 128>}]} {
    %c0 = arith.constant 0 : index
    %c0_0 = arith.constant 0 : index
    %0 = vector.load %arg1[%c0, %c0_0] : memref<8x32xf32, #tpu.memory_space<vmem>>, vector<8x32xf32>
    %1 = arith.truncf %0 : vector<8x32xf32> to vector<8x32xbf16>
    %c0_1 = arith.constant 0 : index
    %c0_2 = arith.constant 0 : index
    %2 = vector.load %arg2[%c0_1, %c0_2] : memref<32x128xbf16, #tpu.memory_space<vmem>>, vector<32x128xbf16>
    %cst = arith.constant dense<0.000000e+00> : vector<8x128xf32>
    %3 = tpu.matmul %1, %2, %cst {dimension_numbers = #tpu.dot_dimension_numbers<[1], [0], [0], [1], [0, 0, 1, 1], [], []>} : vector<8x32xbf16>, vector<32x128xbf16>, vector<8x128xf32> -> vector<8x128xf32>
    %c0_3 = arith.constant 0 : index
    %c0_4 = arith.constant 0 : index
    %4 = vector.load %arg3[%c0_3, %c0_4] : memref<1x128xf32, #tpu.memory_space<vmem>>, vector<1x128xf32>
    %5 = vector.broadcast %4 : vector<1x128xf32> to vector<8x128xf32>
    %6 = arith.addf %3, %5 : vector<8x128xf32>
    %cst_5 = arith.constant 0.000000e+00 : f32
    %7 = vector.broadcast %cst_5 : f32 to vector<8x128xf32>
    %8 = arith.maximumf %6, %7 : vector<8x128xf32>
    %9 = arith.truncf %8 : vector<8x128xf32> to vector<8x128xbf16>
    %c0_6 = arith.constant 0 : index
    %c0_7 = arith.constant 0 : index
    %10 = vector.load %arg4[%c0_6, %c0_7] : memref<128x128xbf16, #tpu.memory_space<vmem>>, vector<128x128xbf16>
    %cst_8 = arith.constant dense<0.000000e+00> : vector<8x128xf32>
    %11 = tpu.matmul %9, %10, %cst_8 {dimension_numbers = #tpu.dot_dimension_numbers<[1], [0], [0], [1], [0, 0, 1, 1], [], []>} : vector<8x128xbf16>, vector<128x128xbf16>, vector<8x128xf32> -> vector<8x128xf32>
    %c0_9 = arith.constant 0 : index
    %c0_10 = arith.constant 0 : index
    %12 = vector.load %arg5[%c0_9, %c0_10] : memref<1x128xf32, #tpu.memory_space<vmem>>, vector<1x128xf32>
    %13 = vector.broadcast %12 : vector<1x128xf32> to vector<8x128xf32>
    %14 = arith.addf %11, %13 : vector<8x128xf32>
    %cst_11 = arith.constant 0.000000e+00 : f32
    %15 = vector.broadcast %cst_11 : f32 to vector<8x128xf32>
    %16 = arith.maximumf %14, %15 : vector<8x128xf32>
    %17 = arith.truncf %16 : vector<8x128xf32> to vector<8x128xbf16>
    %c0_12 = arith.constant 0 : index
    %c0_13 = arith.constant 0 : index
    %18 = vector.load %arg6[%c0_12, %c0_13] : memref<128x128xbf16, #tpu.memory_space<vmem>>, vector<128x128xbf16>
    %cst_14 = arith.constant dense<0.000000e+00> : vector<8x128xf32>
    %19 = tpu.matmul %17, %18, %cst_14 {dimension_numbers = #tpu.dot_dimension_numbers<[1], [0], [0], [1], [0, 0, 1, 1], [], []>} : vector<8x128xbf16>, vector<128x128xbf16>, vector<8x128xf32> -> vector<8x128xf32>
    %c0_15 = arith.constant 0 : index
    %c0_16 = arith.constant 0 : index
    %20 = vector.load %arg7[%c0_15, %c0_16] : memref<1x128xf32, #tpu.memory_space<vmem>>, vector<1x128xf32>
    %21 = vector.broadcast %20 : vector<1x128xf32> to vector<8x128xf32>
    %22 = arith.addf %19, %21 : vector<8x128xf32>
    %23 = arith.truncf %22 : vector<8x128xf32> to vector<8x128xbf16>
    %c0_17 = arith.constant 0 : index
    %c0_18 = arith.constant 0 : index
    %24 = vector.load %arg8[%c0_17, %c0_18] : memref<8x128xbf16, #tpu.memory_space<vmem>>, vector<8x128xbf16>
    tpu.vector_store %arg8[%c0_17, %c0_18], %23 {strides = array<i32>} : memref<8x128xbf16, #tpu.memory_space<vmem>>, vector<8x128xbf16>,
    return
  }
  func.func @transform_0(%arg0: i32) -> (i32, i32) {
    %c0_i32 = arith.constant 0 : i32
    %c0_i32_0 = arith.constant 0 : i32
    return %arg0, %c0_i32 : i32, i32
  }
  func.func @transform_1(%arg0: i32) -> (i32, i32) {
    %c0_i32 = arith.constant 0 : i32
    %c0_i32_0 = arith.constant 0 : i32
    %c0_i32_1 = arith.constant 0 : i32
    return %c0_i32, %c0_i32_0 : i32, i32
  }
  func.func @transform_2(%arg0: i32) -> (i32, i32) {
    %c0_i32 = arith.constant 0 : i32
    %c0_i32_0 = arith.constant 0 : i32
    %c0_i32_1 = arith.constant 0 : i32
    return %c0_i32, %c0_i32_0 : i32, i32
  }
  func.func @transform_3(%arg0: i32) -> (i32, i32) {
    %c0_i32 = arith.constant 0 : i32
    %c0_i32_0 = arith.constant 0 : i32
    %c0_i32_1 = arith.constant 0 : i32
    return %c0_i32, %c0_i32_0 : i32, i32
  }
  func.func @transform_4(%arg0: i32) -> (i32, i32) {
    %c0_i32 = arith.constant 0 : i32
    %c0_i32_0 = arith.constant 0 : i32
    %c0_i32_1 = arith.constant 0 : i32
    return %c0_i32, %c0_i32_0 : i32, i32
  }
  func.func @transform_5(%arg0: i32) -> (i32, i32) {
    %c0_i32 = arith.constant 0 : i32
    %c0_i32_0 = arith.constant 0 : i32
    %c0_i32_1 = arith.constant 0 : i32
    return %c0_i32, %c0_i32_0 : i32, i32
  }
  func.func @transform_6(%arg0: i32) -> (i32, i32) {
    %c0_i32 = arith.constant 0 : i32
    %c0_i32_0 = arith.constant 0 : i32
    %c0_i32_1 = arith.constant 0 : i32
    return %c0_i32, %c0_i32_0 : i32, i32
  }
  func.func @transform_7(%arg0: i32) -> (i32, i32) {
    %c0_i32 = arith.constant 0 : i32
    %c0_i32_0 = arith.constant 0 : i32
    return %arg0, %c0_i32 : i32, i32
  }
}

</mosaic_0001>

<llo_original>
// kernel: mlp_forward_padded.1
$region0: #{mlp_forward_padded.1}
  #allocation0 [shape = 'u32[]', space=smem, size = 0x4, offset = 0x4, fixed_abs, tag = 'smem constant byte address 0x4 - core index']
  #allocation1 [shape = 'u32[144,128]{1,0:T(1,128)}', space=vmem, size = 0x12000, scoped, tag = 'internal scratch']
  %s0 = inlined_call_operand.hbm [shape: f32[8,32], index: 0, kind: input, shape index: {}]
  %s1 = inlined_call_operand.hbm [shape: bf16[32,128], index: 1, kind: input, shape index: {}]
  %s2 = inlined_call_operand.vmem [shape: f32[1,128], index: 2, kind: input, shape index: {}]
  %s3 = inlined_call_operand.hbm [shape: bf16[128,128], index: 3, kind: input, shape index: {}]
  %s4 = inlined_call_operand.vmem [shape: f32[1,128], index: 4, kind: input, shape index: {}]
  %s5 = inlined_call_operand.hbm [shape: bf16[128,128], index: 5, kind: input, shape index: {}]
  %s6 = inlined_call_operand.vmem [shape: f32[1,128], index: 6, kind: input, shape index: {}]
  %s7 = inlined_call_operand.hbm [shape: bf16[8,128], index: 7, kind: output, shape index: {}]
  %s8 = sld [smem:[#allocation0]]
  $region54: #{mlp_forward_padded.1} parent=0
    _
  %s10 = ssub.s32 1, %s8
  %s11 = scalar_select 0, %s10, %s8
  $region1: #{mlp_forward_padded.1} parent=0
    #allocation2 [shape = 'u8[4096]{0}', space=vmem, size = 0x1000, scoped, tag = 'input window, operand 0, single buffered']
    #allocation3 [shape = 's32[1]{0}', space=sflag, size = 0x4, scoped, tag = 'scoped memory for mlp_forward_padded.1']
    #allocation4 [shape = 's32[1]{0}', space=sflag, size = 0x4, scoped, tag = 'scoped memory for mlp_forward_padded.1']
    #allocation5 [shape = 'u8[8192]{0}', space=vmem, size = 0x2000, scoped, tag = 'input window, operand 1, single buffered']
    #allocation6 [shape = 's32[1]{0}', space=sflag, size = 0x4, scoped, tag = 'scoped memory for mlp_forward_padded.1']
    #allocation7 [shape = 'u8[32768]{0}', space=vmem, size = 0x8000, scoped, tag = 'input window, operand 3, single buffered']
    #allocation8 [shape = 'u8[32768]{0}', space=vmem, size = 0x8000, scoped, tag = 'input window, operand 5, single buffered']
    #allocation9 [shape = 's32[1]{0}', space=sflag, size = 0x4, scoped, tag = 'scoped memory for mlp_forward_padded.1']
    #allocation10 [shape = 'u8[2048]{0}', space=vmem, size = 0x800, scoped, tag = 'output window, operand 0, single buffered']
    %12 = vsyncpa [#allocation3], 0
    %13 = vsyncpa [#allocation6], 0
    %14 = vsyncpa [#allocation9], 0
    %15 = vsyncpa [#allocation4], 0
    // Predicated region
    $region2: #{mlp_forward_padded.1} parent=1 // pred_check
      _
    $region3: #{mlp_forward_padded.1} parent=1 // pred_check_branch
      %17 = sbr.rel (0) target = $region5
    $region4: #{mlp_forward_padded.1} parent=1 // pred_region
      %s19 = ssub.s32 128, 128
      %20 = vsyncadd [#allocation3], %s19
      %s22 = sshll.u32 [#allocation2], 4
      %s23 = int_to_ptr.vmem [resolvable:$true] %s22
      %25 = dma.hbm_to_vmem [thread:$0]  %s0, 128, %s23, [#allocation3]
    $region5: #{mlp_forward_padded.1} parent=1 // pred_fallthru
      _
    // Predicated region
    $region6: #{mlp_forward_padded.1} parent=1 // pred_check
      _
    $region7: #{mlp_forward_padded.1} parent=1 // pred_check_branch
      %27 = sbr.rel (0) target = $region9
    $region8: #{mlp_forward_padded.1} parent=1 // pred_region
      %s29 = ssub.s32 256, 256
      %30 = vsyncadd [#allocation6], %s29
      %s31 = sshll.u32 [#allocation5], 4
      %s32 = int_to_ptr.vmem [resolvable:$true] %s31
      %37 = dma.hbm_to_vmem [thread:$0]  %s1, 256, %s32, [#allocation6], 64, 64, 4
    $region9: #{mlp_forward_padded.1} parent=1 // pred_fallthru
      _
    // Predicated region
    $region10: #{mlp_forward_padded.1} parent=1 // pred_check
      _
    $region11: #{mlp_forward_padded.1} parent=1 // pred_check_branch
      %39 = sbr.rel (0) target = $region13
    $region12: #{mlp_forward_padded.1} parent=1 // pred_region
      _
    $region13: #{mlp_forward_padded.1} parent=1 // pred_fallthru
      _
    // Predicated region
    $region14: #{mlp_forward_padded.1} parent=1 // pred_check
      _
    $region15: #{mlp_forward_padded.1} parent=1 // pred_check_branch
      %41 = sbr.rel (0) target = $region17
    $region16: #{mlp_forward_padded.1} parent=1 // pred_region
      %s43 = ssub.s32 1024, 1024
      %44 = vsyncadd [#allocation6], %s43
      %s45 = sshll.u32 [#allocation7], 4
      %s46 = int_to_ptr.vmem [resolvable:$true] %s45
      %51 = dma.hbm_to_vmem [thread:$0]  %s3, 1024, %s46, [#allocation6], 64, 64, 4
    $region17: #{mlp_forward_padded.1} parent=1 // pred_fallthru
      _
    // Predicated region
    $region18: #{mlp_forward_padded.1} parent=1 // pred_check
      _
    $region19: #{mlp_forward_padded.1} parent=1 // pred_check_branch
      %53 = sbr.rel (0) target = $region21
    $region20: #{mlp_forward_padded.1} parent=1 // pred_region
      _
    $region21: #{mlp_forward_padded.1} parent=1 // pred_fallthru
      _
    // Predicated region
    $region22: #{mlp_forward_padded.1} parent=1 // pred_check
      _
    $region23: #{mlp_forward_padded.1} parent=1 // pred_check_branch
      %55 = sbr.rel (0) target = $region25
    $region24: #{mlp_forward_padded.1} parent=1 // pred_region
      %s57 = ssub.s32 1024, 1024
      %58 = vsyncadd [#allocation9], %s57
      %s59 = sshll.u32 [#allocation8], 4
      %s60 = int_to_ptr.vmem [resolvable:$true] %s59
      %65 = dma.hbm_to_vmem [thread:$0]  %s5, 1024, %s60, [#allocation9], 64, 64, 4
    $region25: #{mlp_forward_padded.1} parent=1 // pred_fallthru
      _
    // Predicated region
    $region26: #{mlp_forward_padded.1} parent=1 // pred_check
      _
    $region27: #{mlp_forward_padded.1} parent=1 // pred_check_branch
      %67 = sbr.rel (0) target = $region29
    $region28: #{mlp_forward_padded.1} parent=1 // pred_region
      _
    $region29: #{mlp_forward_padded.1} parent=1 // pred_fallthru
      _
    // Predicated region
    $region30: #{mlp_forward_padded.1} parent=1 // pred_check
      _
    $region31: #{mlp_forward_padded.1} parent=1 // pred_check_branch
      %69 = sbr.rel (0) target = $region33
    $region32: #{mlp_forward_padded.1} parent=1 // pred_region
      %70 = dma.done [#allocation3], 128
    $region33: #{mlp_forward_padded.1} parent=1 // pred_fallthru
      _
    // Predicated region
    $region34: #{mlp_forward_padded.1} parent=1 // pred_check
      _
    $region35: #{mlp_forward_padded.1} parent=1 // pred_check_branch
      %72 = sbr.rel (0) target = $region37
    $region36: #{mlp_forward_padded.1} parent=1 // pred_region
      %73 = dma.done [#allocation6], 256
    $region37: #{mlp_forward_padded.1} parent=1 // pred_fallthru
      _
    // Predicated region
    $region38: #{mlp_forward_padded.1} parent=1 // pred_check
      _
    $region39: #{mlp_forward_padded.1} parent=1 // pred_check_branch
      %75 = sbr.rel (0) target = $region41
    $region40: #{mlp_forward_padded.1} parent=1 // pred_region
      %76 = dma.done [#allocation6], 1024
    $region41: #{mlp_forward_padded.1} parent=1 // pred_fallthru
      _
    // Predicated region
    $region42: #{mlp_forward_padded.1} parent=1 // pred_check
      _
    $region43: #{mlp_forward_padded.1} parent=1 // pred_check_branch
      %78 = sbr.rel (0) target = $region45
    $region44: #{mlp_forward_padded.1} parent=1 // pred_region
      %79 = dma.done [#allocation9], 1024
    $region45: #{mlp_forward_padded.1} parent=1 // pred_fallthru
      _
    %v81 = vld [vmem:[#allocation2] sm:$0xff]
    %v82 = vpack.c.bf16 %v81, %v81
    %v83 = vld [vmem:[#allocation5] sm:$0xf]
    %v84 = vld [vmem:[#allocation5 + $0x4] sm:$0xf]
    %v85 = vld [vmem:[#allocation5 + $0x8] sm:$0xf]
    %v86 = vld [vmem:[#allocation5 + $0xc] sm:$0xf]
    %v87 = vld [vmem:[%s2] sm:$0x1]
    %v89 = vlaneseq
    %v90 = vshrl.u32 %v89, 7
    %v91 = vsub.s32 0, %v90
    %v92 = vrot.slane %v87, %v91
    %v98 = vunpack.c.l.b16 %v83
    %v99 = vunpack.c.l.b16 %v84
    %v100 = vunpack.c.l.b16 %v85
    %v101 = vunpack.c.l.b16 %v86
    %v102 = vpack.c.b16 %v99, %v98
    %v103 = vpack.c.b16 %v101, %v100
    %vm106 = vcmask 261120
    %v108 = vsel %vm106, %v82, 0
    %110 = vmatprep.subr.bf16.mxu0 0
    %111 = vmatpush1.bf16.msra.mxu0 %v102
    %112 = vmatprep.subr.bf16.mxu0 0
    %113 = vmatpush1.bf16.msra.mxu0 %v103
    %114 = vmatprep.subr.bf16.mxu0 0
    %115 = vmatpush1.bf16.msra.mxu0 0
    %116 = vmatprep.subr.bf16.mxu0 0
    %117 = vmatpush1.bf16.msra.mxu0 0
    %118 = vmatprep.subr.bf16.mxu0 0
    %119 = vmatpush1.bf16.msra.mxu0 0
    %120 = vmatprep.subr.bf16.mxu0 0
    %121 = vmatpush1.bf16.msra.mxu0 0
    %122 = vmatprep.subr.bf16.mxu0 0
    %123 = vmatpush1.bf16.msra.mxu0 0
    %124 = vmatprep.subr.bf16.mxu0 0
    %125 = vmatpush1.bf16.msra.mxu0 0
    %126 = vmatprep.subr.bf16.mxu0 0
    %127 = vmatpush1.bf16.msra.mxu0 0
    %128 = vmatprep.subr.bf16.mxu0 0
    %129 = vmatpush1.bf16.msra.mxu0 0
    %130 = vmatprep.subr.bf16.mxu0 0
    %131 = vmatpush1.bf16.msra.mxu0 0
    %132 = vmatprep.subr.bf16.mxu0 0
    %133 = vmatpush1.bf16.msra.mxu0 0
    %134 = vmatprep.subr.bf16.mxu0 0
    %135 = vmatpush1.bf16.msra.mxu0 0
    %136 = vmatprep.subr.bf16.mxu0 0
    %137 = vmatpush1.bf16.msra.mxu0 0
    %138 = vmatprep.subr.bf16.mxu0 0
    %139 = vmatpush1.bf16.msra.mxu0 0
    %140 = vmatprep.subr.bf16.mxu0 0
    %141 = vmatpush1.bf16.msra.mxu0 0
    %142 = vmatprep.mubr.bf16.mxu0 0
    %143 = vmatmul.mubr.bf16.gmra.mrb[0].mxu0 %v108
    %v144 = vpop.f32.mrb[0].mxu0
    %v145 = vadd.f32 %v92, %v144
    %v146 = vpop.f32.mrb[0].mxu0
    %v147 = vpop.f32.mrb[0].mxu0
    %v148 = vpop.f32.mrb[0].mxu0
    %149 = vdwg.mxu0
    %v150 = vmax.f32 %v145, 0.0
    %v151 = vpack.c.bf16 %v150, %v150
    %v152 = vld [vmem:[#allocation7] sm:$0xf]
    %v153 = vld [vmem:[#allocation7 + $0x4] sm:$0xf]
    %v154 = vld [vmem:[#allocation7 + $0x8] sm:$0xf]
    %v155 = vld [vmem:[#allocation7 + $0xc] sm:$0xf]
    %v156 = vld [vmem:[#allocation7 + $0x10] sm:$0xf]
    %v157 = vld [vmem:[#allocation7 + $0x14] sm:$0xf]
    %v158 = vld [vmem:[#allocation7 + $0x18] sm:$0xf]
    %v159 = vld [vmem:[#allocation7 + $0x1c] sm:$0xf]
    %v160 = vld [vmem:[#allocation7 + $0x20] sm:$0xf]
    %v161 = vld [vmem:[#allocation7 + $0x24] sm:$0xf]
    %v162 = vld [vmem:[#allocation7 + $0x28] sm:$0xf]
    %v163 = vld [vmem:[#allocation7 + $0x2c] sm:$0xf]
    %v164 = vld [vmem:[#allocation7 + $0x30] sm:$0xf]
    %v165 = vld [vmem:[#allocation7 + $0x34] sm:$0xf]
    %v166 = vld [vmem:[#allocation7 + $0x38] sm:$0xf]
    %v167 = vld [vmem:[#allocation7 + $0x3c] sm:$0xf]
    %v168 = vld [vmem:[%s4] sm:$0x1]
    %v170 = vlaneseq
    %v171 = vshrl.u32 %v170, 7
    %v172 = vsub.s32 0, %v171
    %v173 = vrot.slane %v168, %v172
    %v191 = vunpack.c.l.b16 %v152
    %v192 = vunpack.c.l.b16 %v153
    %v193 = vunpack.c.l.b16 %v154
    %v194 = vunpack.c.l.b16 %v155
    %v195 = vunpack.c.l.b16 %v156
    %v196 = vunpack.c.l.b16 %v157
    %v197 = vunpack.c.l.b16 %v158
    %v198 = vunpack.c.l.b16 %v159
    %v199 = vunpack.c.l.b16 %v160
    %v200 = vunpack.c.l.b16 %v161
    %v201 = vunpack.c.l.b16 %v162
    %v202 = vunpack.c.l.b16 %v163
    %v203 = vunpack.c.l.b16 %v164
    %v204 = vunpack.c.l.b16 %v165
    %v205 = vunpack.c.l.b16 %v166
    %v206 = vunpack.c.l.b16 %v167
    %v207 = vpack.c.b16 %v192, %v191
    %v208 = vpack.c.b16 %v194, %v193
    %v209 = vpack.c.b16 %v196, %v195
    %v210 = vpack.c.b16 %v198, %v197
    %v211 = vpack.c.b16 %v200, %v199
    %v212 = vpack.c.b16 %v202, %v201
    %v213 = vpack.c.b16 %v204, %v203
    %v214 = vpack.c.b16 %v206, %v205
    %223 = vmatprep.subr.bf16.mxu0 0
    %224 = vmatpush1.bf16.msra.mxu0 %v207
    %225 = vmatprep.subr.bf16.mxu0 0
    %226 = vmatpush1.bf16.msra.mxu0 %v208
    %227 = vmatprep.subr.bf16.mxu0 0
    %228 = vmatpush1.bf16.msra.mxu0 %v209
    %229 = vmatprep.subr.bf16.mxu0 0
    %230 = vmatpush1.bf16.msra.mxu0 %v210
    %231 = vmatprep.subr.bf16.mxu0 0
    %232 = vmatpush1.bf16.msra.mxu0 %v211
    %233 = vmatprep.subr.bf16.mxu0 0
    %234 = vmatpush1.bf16.msra.mxu0 %v212
    %235 = vmatprep.subr.bf16.mxu0 0
    %236 = vmatpush1.bf16.msra.mxu0 %v213
    %237 = vmatprep.subr.bf16.mxu0 0
    %238 = vmatpush1.bf16.msra.mxu0 %v214
    %239 = vmatprep.subr.bf16.mxu0 0
    %240 = vmatpush1.bf16.msra.mxu0 0
    %241 = vmatprep.subr.bf16.mxu0 0
    %242 = vmatpush1.bf16.msra.mxu0 0
    %243 = vmatprep.subr.bf16.mxu0 0
    %244 = vmatpush1.bf16.msra.mxu0 0
    %245 = vmatprep.subr.bf16.mxu0 0
    %246 = vmatpush1.bf16.msra.mxu0 0
    %247 = vmatprep.subr.bf16.mxu0 0
    %248 = vmatpush1.bf16.msra.mxu0 0
    %249 = vmatprep.subr.bf16.mxu0 0
    %250 = vmatpush1.bf16.msra.mxu0 0
    %251 = vmatprep.subr.bf16.mxu0 0
    %252 = vmatpush1.bf16.msra.mxu0 0
    %253 = vmatprep.subr.bf16.mxu0 0
    %254 = vmatpush1.bf16.msra.mxu0 0
    %255 = vmatprep.mubr.bf16.mxu0 0
    %256 = vmatmul.mubr.bf16.gmra.mrb[0].mxu0 %v151
    %v257 = vpop.f32.mrb[0].mxu0
    %v258 = vadd.f32 %v173, %v257
    %v259 = vpop.f32.mrb[0].mxu0
    %v260 = vpop.f32.mrb[0].mxu0
    %v261 = vpop.f32.mrb[0].mxu0
    %262 = vdwg.mxu0
    %v263 = vmax.f32 %v258, 0.0
    %v264 = vpack.c.bf16 %v263, %v263
    %v265 = vld [vmem:[#allocation8] sm:$0xf]
    %v266 = vld [vmem:[#allocation8 + $0x4] sm:$0xf]
    %v267 = vld [vmem:[#allocation8 + $0x8] sm:$0xf]
    %v268 = vld [vmem:[#allocation8 + $0xc] sm:$0xf]
    %v269 = vld [vmem:[#allocation8 + $0x10] sm:$0xf]
    %v270 = vld [vmem:[#allocation8 + $0x14] sm:$0xf]
    %v271 = vld [vmem:[#allocation8 + $0x18] sm:$0xf]
    %v272 = vld [vmem:[#allocation8 + $0x1c] sm:$0xf]
    %v273 = vld [vmem:[#allocation8 + $0x20] sm:$0xf]
    %v274 = vld [vmem:[#allocation8 + $0x24] sm:$0xf]
    %v275 = vld [vmem:[#allocation8 + $0x28] sm:$0xf]
    %v276 = vld [vmem:[#allocation8 + $0x2c] sm:$0xf]
    %v277 = vld [vmem:[#allocation8 + $0x30] sm:$0xf]
    %v278 = vld [vmem:[#allocation8 + $0x34] sm:$0xf]
    %v279 = vld [vmem:[#allocation8 + $0x38] sm:$0xf]
    %v280 = vld [vmem:[#allocation8 + $0x3c] sm:$0xf]
    %v281 = vld [vmem:[%s6] sm:$0x1]
    %v283 = vlaneseq
    %v284 = vshrl.u32 %v283, 7
    %v285 = vsub.s32 0, %v284
    %v286 = vrot.slane %v281, %v285
    %v304 = vunpack.c.l.b16 %v265
    %v305 = vunpack.c.l.b16 %v266
    %v306 = vunpack.c.l.b16 %v267
    %v307 = vunpack.c.l.b16 %v268
    %v308 = vunpack.c.l.b16 %v269
    %v309 = vunpack.c.l.b16 %v270
    %v310 = vunpack.c.l.b16 %v271
    %v311 = vunpack.c.l.b16 %v272
    %v312 = vunpack.c.l.b16 %v273
    %v313 = vunpack.c.l.b16 %v274
    %v314 = vunpack.c.l.b16 %v275
    %v315 = vunpack.c.l.b16 %v276
    %v316 = vunpack.c.l.b16 %v277
    %v317 = vunpack.c.l.b16 %v278
    %v318 = vunpack.c.l.b16 %v279
    %v319 = vunpack.c.l.b16 %v280
    %v320 = vpack.c.b16 %v305, %v304
    %v321 = vpack.c.b16 %v307, %v306
    %v322 = vpack.c.b16 %v309, %v308
    %v323 = vpack.c.b16 %v311, %v310
    %v324 = vpack.c.b16 %v313, %v312
    %v325 = vpack.c.b16 %v315, %v314
    %v326 = vpack.c.b16 %v317, %v316
    %v327 = vpack.c.b16 %v319, %v318
    %336 = vmatprep.subr.bf16.mxu0 0
    %337 = vmatpush1.bf16.msra.mxu0 %v320
    %338 = vmatprep.subr.bf16.mxu0 0
    %339 = vmatpush1.bf16.msra.mxu0 %v321
    %340 = vmatprep.subr.bf16.mxu0 0
    %341 = vmatpush1.bf16.msra.mxu0 %v322
    %342 = vmatprep.subr.bf16.mxu0 0
    %343 = vmatpush1.bf16.msra.mxu0 %v323
    %344 = vmatprep.subr.bf16.mxu0 0
    %345 = vmatpush1.bf16.msra.mxu0 %v324
    %346 = vmatprep.subr.bf16.mxu0 0
    %347 = vmatpush1.bf16.msra.mxu0 %v325
    %348 = vmatprep.subr.bf16.mxu0 0
    %349 = vmatpush1.bf16.msra.mxu0 %v326
    %350 = vmatprep.subr.bf16.mxu0 0
    %351 = vmatpush1.bf16.msra.mxu0 %v327
    %352 = vmatprep.subr.bf16.mxu0 0
    %353 = vmatpush1.bf16.msra.mxu0 0
    %354 = vmatprep.subr.bf16.mxu0 0
    %355 = vmatpush1.bf16.msra.mxu0 0
    %356 = vmatprep.subr.bf16.mxu0 0
    %357 = vmatpush1.bf16.msra.mxu0 0
    %358 = vmatprep.subr.bf16.mxu0 0
    %359 = vmatpush1.bf16.msra.mxu0 0
    %360 = vmatprep.subr.bf16.mxu0 0
    %361 = vmatpush1.bf16.msra.mxu0 0
    %362 = vmatprep.subr.bf16.mxu0 0
    %363 = vmatpush1.bf16.msra.mxu0 0
    %364 = vmatprep.subr.bf16.mxu0 0
    %365 = vmatpush1.bf16.msra.mxu0 0
    %366 = vmatprep.subr.bf16.mxu0 0
    %367 = vmatpush1.bf16.msra.mxu0 0
    %368 = vmatprep.mubr.bf16.mxu0 0
    %369 = vmatmul.mubr.bf16.gmra.mrb[0].mxu0 %v264
    %v370 = vpop.f32.mrb[0].mxu0
    %v371 = vadd.f32 %v286, %v370
    %v372 = vpop.f32.mrb[0].mxu0
    %v373 = vpop.f32.mrb[0].mxu0
    %v374 = vpop.f32.mrb[0].mxu0
    %375 = vdwg.mxu0
    %v376 = vpack.c.bf16 %v371, %v371
    %377 = vst [vmem:[#allocation10] sm:$0xf] %v376
    // Predicated region
    $region46: #{mlp_forward_padded.1} parent=1 // pred_check
      _
    $region47: #{mlp_forward_padded.1} parent=1 // pred_check_branch
      %379 = sbr.rel (0) target = $region49
    $region48: #{mlp_forward_padded.1} parent=1 // pred_region
      %s381 = ssub.s32 64, 64
      %382 = vsyncadd [#allocation4], %s381
      %s384 = sshll.u32 [#allocation10], 4
      %s385 = int_to_ptr.vmem [resolvable:$true] %s384
      %387 = dma.vmem_to_hbm [thread:$0]  %s385, 64, %s7, [#allocation4]
    $region49: #{mlp_forward_padded.1} parent=1 // pred_fallthru
      _
    // Predicated region
    $region50: #{mlp_forward_padded.1} parent=1 // pred_check
      _
    $region51: #{mlp_forward_padded.1} parent=1 // pred_check_branch
      %389 = sbr.rel (0) target = $region53
    $region52: #{mlp_forward_padded.1} parent=1 // pred_region
      %390 = dma.done [#allocation4], 64
    $region53: #{mlp_forward_padded.1} parent=1 // pred_fallthru
      _
    %391 = vsyncpa [#allocation3], 1
    %392 = vsyncpa [#allocation6], 1
    %393 = vsyncpa [#allocation9], 1
    %394 = vsyncpa [#allocation4], 1

</llo_original>
